<compile_context>
chip_gen: v5e
topology: v5e:2x2
jax: 0.10.0
libtpu: 0.0.40
codegen_flags: <defaults>
</compile_context>

<pallas_src>
import functools

import jax
import jax.numpy as jnp
from jax import lax
from jax.experimental import pallas as pl
from jax.experimental.pallas import tpu as pltpu


def _make_kernel(weight: float, margin: float, temperature: float, eps: float = 1e-8):
    inv_temp = 1.0 / temperature
    eps_sq = eps * eps

    def kernel(x_ref, t_ref, o_ref, gx_ref, sqt_ref):
        k = pl.program_id(0)
        nk = pl.num_programs(0)

        @pl.when(k == 0)
        def _():
            gx_ref[...] = jnp.zeros_like(gx_ref)
            sqt_ref[...] = jnp.zeros_like(sqt_ref)

        # Partial Gram of model_output over this D-tile (MXU; contracting the
        # last dims of both operands -> no materialized transpose).
        x = x_ref[...]                                   # [B, TD], native dtype
        dn = (((1,), (1,)), ((), ()))
        gx_ref[...] += lax.dot_general(x, x, dn, preferred_element_type=jnp.float32)

        # Target similarity matrix only contributes via its diagonal, which
        # depends solely on row norms -> cheap per-tile VPU accumulation.
        t = t_ref[...].astype(jnp.float32)               # [B, TD]
        sqt_ref[...] += jnp.sum(t * t, axis=1, keepdims=True)

        @pl.when(k == nk - 1)
        def _():
            gx = gx_ref[...]                              # [B, B] f32
            b = gx.shape[0]

            rows = lax.broadcasted_iota(jnp.int32, (b, b), 0)
            cols = lax.broadcasted_iota(jnp.int32, (b, b), 1)
            diag = rows == cols

            # diag(Gx) = ||x_i||^2 via a cheap lane-direction masked reduce
            # (no axis=0 sublane reduce anywhere in the epilogue).
            sqx = jnp.sum(jnp.where(diag, gx, 0.0), axis=1, keepdims=True)   # [B,1]
            sqt = sqt_ref[...]                                               # [B,1]

            # max(||v||, eps) == sqrt(max(||v||^2, eps^2)); rsqrt runs on the EUP.
            inv_x = lax.rsqrt(jnp.maximum(sqx, eps_sq))                      # [B,1]
            inv_t = lax.rsqrt(jnp.maximum(sqt, eps_sq))                      # [B,1]

            # Full normalization matrix as an outer product of ONE rsqrt'd
            # vector (tiny K=1 matmul) -> no transpose, no sublane reduce.
            inv_outer = lax.dot_general(inv_x, inv_x, dn,
                                        preferred_element_type=jnp.float32)  # [B,B]
            sim_x = gx * inv_outer * jnp.float32(inv_temp)

            # pos term touches the diagonal only: self cosine-similarity is
            # ||v||^2 / max(||v||, eps)^2 (== 1 unless the norm is < eps).
            diag_x = sqx * inv_x * inv_x                                     # [B,1]
            diag_t = sqt * inv_t * inv_t
            pos_vec = ((diag_x - diag_t) * jnp.float32(inv_temp)) ** 2       # [B,1]

            # Fuse pos + neg into a single reduction: pos on the diagonal,
            # relu(sim - margin) off-diagonal.
            neg = jnp.maximum(sim_x - jnp.float32(margin), 0.0)
            combined = jnp.where(diag, pos_vec, neg)
            total = jnp.sum(combined)

            denom = jnp.float32(b * (b - 1))
            o_ref[0, 0] = jnp.float32(weight) * total / denom

    return kernel


def _vmem_limit_bytes() -> int:
    """Generation-aware scoped-VMEM limit (v5e/v6e: 128 MiB phys, v7x: 64 MiB)."""
    phys = 64 * 1024 * 1024                      # conservative default (v7x physical)
    try:
        cap = getattr(pltpu.get_tpu_info(), "vmem_capacity_bytes", None)
        if cap:
            phys = int(cap)
    except Exception:
        pass
    # 75% of physical, capped; leaves headroom for compiler-internal scratch.
    return max(32 * 1024 * 1024, min((phys * 3) // 4, 100 * 1024 * 1024))


def _select_d_tile(B: int, D: int, itemsize: int, vmem_budget: int):
    """Pick (TD, Dp): D-tile size and (possibly padded) D, maximizing TD."""
    b8 = max(B, 8)
    b_lanes = max(-(-B // 128) * 128, 128)
    # Gram accumulator + [B,1] norm scratch (lane-padded) + headroom.
    fixed = b8 * b_lanes * 4 + 2 * b8 * 128 * 4 + (2 << 20)
    avail = max(vmem_budget - fixed, 4 << 20)
    # Two inputs, each double-buffered by the BlockSpec pipeline.
    max_td = max(128, avail // (4 * b8 * itemsize))
    if D <= max_td:
        return D, D                               # single grid step, no padding
    cap = max(128, (min(max_td, D) // 128) * 128)
    if D % 128 == 0:
        # Largest 128-multiple divisor of D that fits -> tiles with no padding.
        for cand in range(cap, 127, -128):
            if D % cand == 0 and (cand >= 512 or cand == cap):
                return cand, D
    # Awkward D: pad up to a multiple of a LARGE tile rather than falling back
    # to a 128-wide tile (which costs 2-3x HBM bandwidth).
    td = cap
    dp = -(-D // td) * td
    return td, dp


@functools.partial(jax.jit, static_argnames=("weight", "margin", "temperature"))
def improved_similarity_loss(model_output: jax.Array, targets: jax.Array,
                             weight: float = 1.0, margin: float = 0.1,
                             temperature: float = 0.05) -> jax.Array:
    assert model_output.shape == targets.shape
    assert model_output.ndim == 2
    B, D = model_output.shape
    assert B >= 2, "batch_size must be >= 2 (divisor B*(B-1) is zero otherwise)"

    vmem_limit = _vmem_limit_bytes()
    TD, Dp = _select_d_tile(B, D, model_output.dtype.itemsize, vmem_limit)

    x, t = model_output, targets
    if Dp != D:
        # Zero padding of the feature axis does not perturb Grams or norms.
        pad = ((0, 0), (0, Dp - D))
        x = jnp.pad(x, pad)
        t = jnp.pad(t, pad)

    grid = (Dp // TD,)
    kernel = _make_kernel(weight, margin, temperature)

    out = pl.pallas_call(
        kernel,
        out_shape=jax.ShapeDtypeStruct((1, 1), jnp.float32),
        grid_spec=pltpu.PrefetchScalarGridSpec(
            num_scalar_prefetch=0,
            grid=grid,
            in_specs=[
                pl.BlockSpec((B, TD), lambda k: (0, k)),
                pl.BlockSpec((B, TD), lambda k: (0, k)),
            ],
            out_specs=pl.BlockSpec(memory_space=pltpu.MemorySpace.SMEM),
            scratch_shapes=[
                pltpu.VMEM((B, B), jnp.float32),   # Gram accumulator (model_output)
                pltpu.VMEM((B, 1), jnp.float32),   # sum(t*t, -1) accumulator
            ],
        ),
        compiler_params=pltpu.CompilerParams(
            dimension_semantics=("arbitrary",),     # D axis is a reduction
            vmem_limit_bytes=vmem_limit,
        ),
    )(x, t)
    return out[0, 0]


def _reference(model_output, targets, weight=1.0, margin=0.1, temperature=0.05,
               eps=1e-8):
    def cos_sim_matrix(a):
        n = jnp.maximum(jnp.linalg.norm(a, axis=-1, keepdims=True), eps)
        an = a / n
        return an @ an.T

    B = model_output.shape[0]
    sim_out = cos_sim_matrix(model_output.astype(jnp.float32)) / temperature
    sim_tgt = cos_sim_matrix(targets.astype(jnp.float32)) / temperature
    mask = jnp.eye(B, dtype=jnp.float32)
    pos = (sim_out - sim_tgt) ** 2 * mask
    neg = jnp.maximum(sim_out - margin, 0.0) * (1.0 - mask)
    return weight * (pos.sum() + neg.sum()) / (B * (B - 1))


if __name__ == "__main__":
    B, D = 8, 32
    weight, margin, temperature = 1.0, 0.1, 0.05

    key = jax.random.PRNGKey(0)
    k1, k2 = jax.random.split(key)
    model_output = jax.random.normal(k1, (B, D), dtype=jnp.float32)
    targets = jax.random.normal(k2, (B, D), dtype=jnp.float32)

    loss = improved_similarity_loss(model_output, targets, weight, margin, temperature)
    loss = jax.block_until_ready(loss)

    ref = _reference(model_output, targets, weight, margin, temperature)
    assert jnp.allclose(loss, ref, atol=1e-4, rtol=1e-4), (loss, ref)

    print("KERNEL_OK")
</pallas_src>

<mosaic_0001>
module attributes {stable_mosaic.version = 11 : i64} {
  func.func @kernel(%arg0: i32, %arg1: memref<8x32xf32, #tpu.memory_space<vmem>>, %arg2: memref<8x32xf32, #tpu.memory_space<vmem>>, %arg3: memref<1x1xf32, #tpu.memory_space<smem>>, %arg4: memref<8x8xf32, #tpu.memory_space<vmem>>, %arg5: memref<8x1xf32, #tpu.memory_space<vmem>>) attributes {dimension_semantics = [#tpu.dimension_semantics<arbitrary>], iteration_bounds = array<i64: 1>, scalar_prefetch = 0 : i64, scratch_operands = 2 : i64, tpu.core_type = #tpu.core_type<tc>, window_params = [{transform_indices = @transform_0, window_bounds = array<i64: 8, 32>}, {transform_indices = @transform_1, window_bounds = array<i64: 8, 32>}, {transform_indices = @transform_2, window_bounds = array<i64: 1, 1>}]} {
    %c0_i32 = arith.constant 0 : i32
    %0 = arith.cmpi eq, %arg0, %c0_i32 : i32
    %1 = arith.extui %0 : i1 to i32
    %c0_i32_0 = arith.constant 0 : i32
    %2 = arith.cmpi ne, %1, %c0_i32_0 : i32
    scf.if %2 {
      %cst_15 = arith.constant 0.000000e+00 : f32
      %18 = vector.broadcast %cst_15 : f32 to vector<8x8xf32>
      %c0_16 = arith.constant 0 : index
      %c0_17 = arith.constant 0 : index
      %19 = vector.load %arg4[%c0_16, %c0_17] : memref<8x8xf32, #tpu.memory_space<vmem>>, vector<8x8xf32>
      tpu.vector_store %arg4[%c0_16, %c0_17], %18 {strides = array<i32>} : memref<8x8xf32, #tpu.memory_space<vmem>>, vector<8x8xf32>,
      %cst_18 = arith.constant 0.000000e+00 : f32
      %20 = vector.broadcast %cst_18 : f32 to vector<8x1xf32>
      %c0_19 = arith.constant 0 : index
      %c0_20 = arith.constant 0 : index
      %21 = vector.load %arg5[%c0_19, %c0_20] : memref<8x1xf32, #tpu.memory_space<vmem>>, vector<8x1xf32>
      tpu.vector_store %arg5[%c0_19, %c0_20], %20 {strides = array<i32>} : memref<8x1xf32, #tpu.memory_space<vmem>>, vector<8x1xf32>,
    } else {
    }
    %c0 = arith.constant 0 : index
    %c0_1 = arith.constant 0 : index
    %3 = vector.load %arg1[%c0, %c0_1] : memref<8x32xf32, #tpu.memory_space<vmem>>, vector<8x32xf32>
    %c0_2 = arith.constant 0 : index
    %c0_3 = arith.constant 0 : index
    %4 = vector.load %arg4[%c0_2, %c0_3] : memref<8x8xf32, #tpu.memory_space<vmem>>, vector<8x8xf32>
    %cst = arith.constant dense<0.000000e+00> : vector<8x8xf32>
    %5 = tpu.matmul %3, %3, %cst {dimension_numbers = #tpu.dot_dimension_numbers<[1], [1], [0], [0], [0, 0, 1, 0], [], []>} : vector<8x32xf32>, vector<8x32xf32>, vector<8x8xf32> -> vector<8x8xf32>
    %6 = arith.addf %4, %5 : vector<8x8xf32>
    %c0_4 = arith.constant 0 : index
    %c0_5 = arith.constant 0 : index
    %7 = vector.load %arg4[%c0_4, %c0_5] : memref<8x8xf32, #tpu.memory_space<vmem>>, vector<8x8xf32>
    tpu.vector_store %arg4[%c0_4, %c0_5], %6 {strides = array<i32>} : memref<8x8xf32, #tpu.memory_space<vmem>>, vector<8x8xf32>,
    %c0_6 = arith.constant 0 : index
    %c0_7 = arith.constant 0 : index
    %8 = vector.load %arg2[%c0_6, %c0_7] : memref<8x32xf32, #tpu.memory_space<vmem>>, vector<8x32xf32>
    %c0_8 = arith.constant 0 : index
    %c0_9 = arith.constant 0 : index
    %9 = vector.load %arg5[%c0_8, %c0_9] : memref<8x1xf32, #tpu.memory_space<vmem>>, vector<8x1xf32>
    %10 = arith.mulf %8, %8 : vector<8x32xf32>
    %cst_10 = arith.constant dense<0.000000e+00> : vector<8xf32>
    %11 = vector.multi_reduction <add>, %10, %cst_10 [1] : vector<8x32xf32> to vector<8xf32>
    %12 = vector.shape_cast %11 : vector<8xf32> to vector<8x1xf32>
    %13 = arith.addf %9, %12 : vector<8x1xf32>
    %c0_11 = arith.constant 0 : index
    %c0_12 = arith.constant 0 : index
    %14 = vector.load %arg5[%c0_11, %c0_12] : memref<8x1xf32, #tpu.memory_space<vmem>>, vector<8x1xf32>
    tpu.vector_store %arg5[%c0_11, %c0_12], %13 {strides = array<i32>} : memref<8x1xf32, #tpu.memory_space<vmem>>, vector<8x1xf32>,
    %c0_i32_13 = arith.constant 0 : i32
    %15 = arith.cmpi eq, %arg0, %c0_i32_13 : i32
    %16 = arith.extui %15 : i1 to i32
    %c0_i32_14 = arith.constant 0 : i32
    %17 = arith.cmpi ne, %16, %c0_i32_14 : i32
    scf.if %17 {
      %c0_15 = arith.constant 0 : index
      %c0_16 = arith.constant 0 : index
      %18 = vector.load %arg4[%c0_15, %c0_16] : memref<8x8xf32, #tpu.memory_space<vmem>>, vector<8x8xf32>
      %19 = tpu.iota {dimensions = array<i32: 0>} : vector<8x8xi32>
      %20 = tpu.iota {dimensions = array<i32: 1>} : vector<8x8xi32>
      %21 = arith.cmpi eq, %19, %20 : vector<8x8xi32>
      %cst_17 = arith.constant 0.000000e+00 : f32
      %22 = vector.broadcast %cst_17 : f32 to vector<8x8xf32>
      %23 = arith.select %21, %18, %22 : vector<8x8xi1>, vector<8x8xf32>
      %cst_18 = arith.constant dense<0.000000e+00> : vector<8xf32>
      %24 = vector.multi_reduction <add>, %23, %cst_18 [1] : vector<8x8xf32> to vector<8xf32>
      %25 = vector.shape_cast %24 : vector<8xf32> to vector<8x1xf32>
      %c0_19 = arith.constant 0 : index
      %c0_20 = arith.constant 0 : index
      %26 = vector.load %arg5[%c0_19, %c0_20] : memref<8x1xf32, #tpu.memory_space<vmem>>, vector<8x1xf32>
      %cst_21 = arith.constant 1.000000e-16 : f32
      %27 = vector.broadcast %cst_21 : f32 to vector<8x1xf32>
      %28 = arith.maximumf %25, %27 : vector<8x1xf32>
      %29 = math.rsqrt %28 : vector<8x1xf32>
      %cst_22 = arith.constant 1.000000e-16 : f32
      %30 = vector.broadcast %cst_22 : f32 to vector<8x1xf32>
      %31 = arith.maximumf %26, %30 : vector<8x1xf32>
      %32 = math.rsqrt %31 : vector<8x1xf32>
      %cst_23 = arith.constant dense<0.000000e+00> : vector<8x8xf32>
      %33 = tpu.matmul %29, %29, %cst_23 {dimension_numbers = #tpu.dot_dimension_numbers<[1], [1], [0], [0], [0, 0, 1, 0], [], []>} : vector<8x1xf32>, vector<8x1xf32>, vector<8x8xf32> -> vector<8x8xf32>
      %34 = arith.mulf %18, %33 : vector<8x8xf32>
      %cst_24 = arith.constant 2.000000e+01 : f32
      %35 = vector.broadcast %cst_24 : f32 to vector<8x8xf32>
      %36 = arith.mulf %34, %35 : vector<8x8xf32>
      %37 = arith.mulf %25, %29 : vector<8x1xf32>
      %38 = arith.mulf %37, %29 : vector<8x1xf32>
      %39 = arith.mulf %26, %32 : vector<8x1xf32>
      %40 = arith.mulf %39, %32 : vector<8x1xf32>
      %41 = arith.subf %38, %40 : vector<8x1xf32>
      %cst_25 = arith.constant 2.000000e+01 : f32
      %42 = vector.broadcast %cst_25 : f32 to vector<8x1xf32>
      %43 = arith.mulf %41, %42 : vector<8x1xf32>
      %44 = arith.mulf %43, %43 : vector<8x1xf32>
      %cst_26 = arith.constant 1.000000e-01 : f32
      %45 = vector.broadcast %cst_26 : f32 to vector<8x8xf32>
      %46 = arith.subf %36, %45 : vector<8x8xf32>
      %cst_27 = arith.constant 0.000000e+00 : f32
      %47 = vector.broadcast %cst_27 : f32 to vector<8x8xf32>
      %48 = arith.maximumf %46, %47 : vector<8x8xf32>
      %49 = vector.shape_cast %44 : vector<8x1xf32> to vector<8x1xf32>
      %50 = vector.broadcast %49 : vector<8x1xf32> to vector<8x8xf32>
      %51 = arith.select %21, %50, %48 : vector<8x8xi1>, vector<8x8xf32>
      %52 = vector.shape_cast %51 : vector<8x8xf32> to vector<1x8x8xf32>
      %cst_28 = arith.constant dense<0.000000e+00> : vector<1xf32>
      %53 = vector.multi_reduction <add>, %52, %cst_28 [1, 2] : vector<1x8x8xf32> to vector<1xf32>
      %54 = vector.shape_cast %53 : vector<1xf32> to vector<1x1x1xf32>
      %55 = vector.extract %54[0, 0, 0] : f32 from vector<1x1x1xf32>
      %cst_29 = arith.constant 1.000000e+00 : f32
      %56 = arith.mulf %cst_29, %55 : f32
      %cst_30 = arith.constant 5.600000e+01 : f32
      %57 = arith.divf %56, %cst_30 : f32
      %c0_31 = arith.constant 0 : index
      %c0_32 = arith.constant 0 : index
      %58 = memref.load %arg3[%c0_31, %c0_32] : memref<1x1xf32, #tpu.memory_space<smem>>
      memref.store %57, %arg3[%c0_31, %c0_32] : memref<1x1xf32, #tpu.memory_space<smem>>
    } else {
    }
    return
  }
  func.func @transform_0(%arg0: i32) -> (i32, i32) {
    %c0_i32 = arith.constant 0 : i32
    %c0_i32_0 = arith.constant 0 : i32
    return %c0_i32, %arg0 : i32, i32
  }
  func.func @transform_1(%arg0: i32) -> (i32, i32) {
    %c0_i32 = arith.constant 0 : i32
    %c0_i32_0 = arith.constant 0 : i32
    return %c0_i32, %arg0 : i32, i32
  }
  func.func @transform_2(%arg0: i32) -> (i32, i32) {
    %c0_i32 = arith.constant 0 : i32
    %c0_i32_0 = arith.constant 0 : i32
    %c0_i32_1 = arith.constant 0 : i32
    return %c0_i32, %c0_i32_0 : i32, i32
  }
}

</mosaic_0001>

<llo_original>
// kernel: improved_similarity_loss.1
$region0: #{improved_similarity_loss.1}
  #allocation0 [shape = 'u32[]', space=smem, size = 0x4, offset = 0x4, fixed_abs, tag = 'smem constant byte address 0x4 - core index']
  #allocation1 [shape = 'u32[72,128]{1,0:T(1,128)}', space=vmem, size = 0x9000, scoped, tag = 'internal scratch']
  #allocation2 [shape = 'f32[8,8]{1,0:T(8,128)}', space=vmem, size = 0x1000, scoped, tag = 'scratch operand']
  #allocation3 [shape = 'f32[8,1]{1,0:T(8,128)}', space=vmem, size = 0x1000, scoped, tag = 'scratch operand']
  %s0 = inlined_call_operand.hbm [shape: f32[8,32], index: 0, kind: input, shape index: {}]
  %s1 = inlined_call_operand.hbm [shape: f32[8,32], index: 1, kind: input, shape index: {}]
  %s2 = inlined_call_operand.hbm [shape: f32[1,1], index: 2, kind: output, shape index: {}]
  %s3 = sld [smem:[#allocation0]]
  $region34: #{improved_similarity_loss.1} parent=0
    _
  %s5 = ssub.s32 1, %s3
  %s6 = scalar_select 0, %s5, %s3
  $region1: #{improved_similarity_loss.1} parent=0
    #allocation4 [shape = 'u8[4096]{0}', space=vmem, size = 0x1000, scoped, tag = 'input window, operand 0, single buffered']
    #allocation5 [shape = 's32[1]{0}', space=sflag, size = 0x4, scoped, tag = 'scoped memory for improved_similarity_loss.1']
    #allocation6 [shape = 's32[1]{0}', space=sflag, size = 0x4, scoped, tag = 'scoped memory for improved_similarity_loss.1']
    #allocation7 [shape = 'u8[4096]{0}', space=vmem, size = 0x1000, scoped, tag = 'input window, operand 1, single buffered']
    #allocation8 [shape = 's32[1]{0}', space=sflag, size = 0x4, scoped, tag = 'scoped memory for improved_similarity_loss.1']
    #allocation9 [shape = 'u8[512]{0}', space=smem, size = 0x200, scoped, tag = 'output window, operand 0, single buffered']
    %7 = vsyncpa [#allocation5], 0
    %8 = vsyncpa [#allocation8], 0
    %9 = vsyncpa [#allocation6], 0
    // Predicated region
    $region2: #{improved_similarity_loss.1} parent=1 // pred_check
      _
    $region3: #{improved_similarity_loss.1} parent=1 // pred_check_branch
      %11 = sbr.rel (0) target = $region5
    $region4: #{improved_similarity_loss.1} parent=1 // pred_region
      %13 = vsyncadd [#allocation5], 0
      %s15 = sshll.u32 %s0, 4
      %s16 = int_to_ptr.hbm [resolvable:$true] %s15
      %s17 = sshll.u32 [#allocation4], 4
      %s18 = int_to_ptr.vmem [resolvable:$true] %s17
      %20 = dma.hbm_to_vmem [thread:$0]  %s16, 128, %s18, [#allocation5]
    $region5: #{improved_similarity_loss.1} parent=1 // pred_fallthru
      _
    // Predicated region
    $region6: #{improved_similarity_loss.1} parent=1 // pred_check
      _
    $region7: #{improved_similarity_loss.1} parent=1 // pred_check_branch
      %22 = sbr.rel (0) target = $region9
    $region8: #{improved_similarity_loss.1} parent=1 // pred_region
      %24 = vsyncadd [#allocation8], 0
      %s26 = sshll.u32 %s1, 4
      %s27 = int_to_ptr.hbm [resolvable:$true] %s26
      %s28 = sshll.u32 [#allocation7], 4
      %s29 = int_to_ptr.vmem [resolvable:$true] %s28
      %31 = dma.hbm_to_vmem [thread:$0]  %s27, 128, %s29, [#allocation8]
    $region9: #{improved_similarity_loss.1} parent=1 // pred_fallthru
      _
    // Predicated region
    $region10: #{improved_similarity_loss.1} parent=1 // pred_check
      _
    $region11: #{improved_similarity_loss.1} parent=1 // pred_check_branch
      %33 = sbr.rel (0) target = $region13
    $region12: #{improved_similarity_loss.1} parent=1 // pred_region
      %35 = dma.done [#allocation5], 128
    $region13: #{improved_similarity_loss.1} parent=1 // pred_fallthru
      _
    // Predicated region
    $region14: #{improved_similarity_loss.1} parent=1 // pred_check
      _
    $region15: #{improved_similarity_loss.1} parent=1 // pred_check_branch
      %37 = sbr.rel (0) target = $region17
    $region16: #{improved_similarity_loss.1} parent=1 // pred_region
      %39 = dma.done [#allocation8], 128
    $region17: #{improved_similarity_loss.1} parent=1 // pred_fallthru
      _
    %p40 = scmp.eq.s32.totalorder 0, 0
    // Predicated region
    $region18: #{improved_similarity_loss.1} parent=1 // pred_check
      %p41 = pneg %p40
    $region19: #{improved_similarity_loss.1} parent=1 // pred_check_branch
      %43 = sbr.rel (%p41) target = $region21
    $region20: #{improved_similarity_loss.1} parent=1 // pred_region
      %vm44 = vcmask 64512
      %45 = vst.msk [vmem:[#allocation2] sm:$0xff] %vm44, 0.0
      %vm46 = vcmask 7168
      %47 = vst.msk [vmem:[#allocation3] sm:$0xff] %vm46, 0.0
    $region21: #{improved_similarity_loss.1} parent=1 // pred_fallthru
      _
    %v48 = vld [vmem:[#allocation4] sm:$0xff]
    %v49 = vld [vmem:[#allocation2] sm:$0xff]
    %vm50 = vcmask 261120
    %v52 = vsel %vm50, %v48, 0
    %54 = vmatpush.xpose.msra.mxu0 0.0
    %55 = vmatpush.xpose.msra.mxu0 0.0
    %56 = vmatpush.xpose.msra.mxu0 0.0
    %57 = vmatpush.xpose.msra.mxu0 0.0
    %58 = vmatpush.xpose.msra.mxu0 0.0
    %59 = vmatpush.xpose.msra.mxu0 0.0
    %60 = vmatpush.xpose.msra.mxu0 0.0
    %61 = vmatpush.xpose.msra.mxu0 0.0
    %62 = vmatpush.xpose.msra.mxu0 0.0
    %63 = vmatpush.xpose.msra.mxu0 0.0
    %64 = vmatpush.xpose.msra.mxu0 0.0
    %65 = vmatpush.xpose.msra.mxu0 0.0
    %66 = vmatpush.xpose.msra.mxu0 0.0
    %67 = vmatpush.xpose.msra.mxu0 0.0
    %68 = vmatpush.xpose.msra.mxu0 0.0
    %69 = vmatpush.xpose.msra.mxu0 %v52
    %70 = vmatmul.f32.gmra.mxu0 %v52
    %v71 = vpop.f32.mrf.mxu0
    %v72 = vadd.f32 0.0, %v71
    %73 = vdwg.mxu0
    %v74 = vadd.f32 %v49, %v72
    %vm75 = vcmask 64512
    %76 = vst.msk [vmem:[#allocation2] sm:$0xff] %vm75, %v74
    %v77 = vld [vmem:[#allocation7] sm:$0xff]
    %v78 = vld [vmem:[#allocation3] sm:$0xff]
    %v79 = vmul.f32 %v77, %v77
    %v80 = vsel %vm50, %v79, 0.0
    %81 = vadd.xlane.f32.xlu0 %v80
    %v82 = vpop.xlane.xlu0 %81
    %v83 = vadd.f32 %v78, %v82
    %vm84 = vcmask 7168
    %85 = vst.msk [vmem:[#allocation3] sm:$0xff] %vm84, %v83
    // Predicated region
    $region22: #{improved_similarity_loss.1} parent=1 // pred_check
      %p86 = pneg %p40
    $region23: #{improved_similarity_loss.1} parent=1 // pred_check_branch
      %88 = sbr.rel (%p86) target = $region25
    $region24: #{improved_similarity_loss.1} parent=1 // pred_region
      %v89 = vld [vmem:[#allocation2] sm:$0xff]
      %v90 = vlaneseq
      %v91 = vshrl.u32 %v90, 7
      %v92 = vlaneseq
      %v93 = vand.u32 %v92, 127
      %vm94 = vcmp.eq.s32.totalorder %v91, %v93
      %v95 = vsel %vm94, %v89, 0.0
      %v96 = vsel %vm75, %v95, 0.0
      %97 = vadd.xlane.f32.xlu0 %v96
      %v98 = vpop.xlane.xlu0 %97
      %v99 = vld [vmem:[#allocation3] sm:$0xff]
      %v100 = vmax.f32 %v98, 1e-16
      %v101 = vrsqrt.pop %v100
      %v102 = vmul.f32 %v101, %v100
      %v103 = vmul.f32 %v102, %v101
      %v104 = vmul.f32 0.5, %v103
      %v105 = vsub.f32 1.5, %v104
      %v106 = vmul.f32 %v101, %v105
      %vm107 = vweird.f32 %v100
      %vm108 = vweird.f32 %v101
      %vm109 = vmor %vm107, %vm108
      %v110 = vsel %vm109, %v101, %v106
      %v111 = vmax.f32 %v99, 1e-16
      %v112 = vrsqrt.pop %v111
      %v113 = vmul.f32 %v112, %v111
      %v114 = vmul.f32 %v113, %v112
      %v115 = vmul.f32 0.5, %v114
      %v116 = vsub.f32 1.5, %v115
      %v117 = vmul.f32 %v112, %v116
      %vm118 = vweird.f32 %v111
      %vm119 = vweird.f32 %v112
      %vm120 = vmor %vm118, %vm119
      %v121 = vsel %vm120, %v112, %v117
      %v123 = vsel %vm84, %v110, 0
      %125 = vmatpush.xpose.msra.mxu0 0.0
      %126 = vmatpush.xpose.msra.mxu0 0.0
      %127 = vmatpush.xpose.msra.mxu0 0.0
      %128 = vmatpush.xpose.msra.mxu0 0.0
      %129 = vmatpush.xpose.msra.mxu0 0.0
      %130 = vmatpush.xpose.msra.mxu0 0.0
      %131 = vmatpush.xpose.msra.mxu0 0.0
      %132 = vmatpush.xpose.msra.mxu0 0.0
      %133 = vmatpush.xpose.msra.mxu0 0.0
      %134 = vmatpush.xpose.msra.mxu0 0.0
      %135 = vmatpush.xpose.msra.mxu0 0.0
      %136 = vmatpush.xpose.msra.mxu0 0.0
      %137 = vmatpush.xpose.msra.mxu0 0.0
      %138 = vmatpush.xpose.msra.mxu0 0.0
      %139 = vmatpush.xpose.msra.mxu0 0.0
      %140 = vmatpush.xpose.msra.mxu0 %v123
      %141 = vmatmul.f32.gmra.mxu0 %v123
      %v142 = vpop.f32.mrf.mxu0
      %v143 = vadd.f32 0.0, %v142
      %144 = vdwg.mxu0
      %v145 = vmul.f32 %v89, %v143
      %v146 = vmul.f32 %v145, 20.0
      %v147 = vmul.f32 %v98, %v110
      %v148 = vmul.f32 %v147, %v110
      %v149 = vmul.f32 %v99, %v121
      %v150 = vmul.f32 %v149, %v121
      %v151 = vsub.f32 %v148, %v150
      %v152 = vmul.f32 %v151, 20.0
      %v153 = vmul.f32 %v152, %v152
      %v154 = vsub.f32 %v146, 0.1
      %v155 = vmax.f32 %v154, 0.0
      %157 = vset.pattern.permute.xlu0 0
      %158 = vperm.xlu0 %157, %v153
      %v159 = vpop.permute.xlu0 %158
      %v161 = vsel %vm94, %v159, %v155
      %v162 = vsel %vm75, %v161, 0.0
      %163 = vadd.xlane.f32.xlu0 %v162
      %v164 = vpop.xlane.xlu0 %163
      %v165 = vrot.slane %v164, 4
      %v166 = vadd.f32 %v164, %v165
      %v167 = vrot.slane %v166, 2
      %v168 = vadd.f32 %v166, %v167
      %v169 = vrot.slane %v168, 1
      %v170 = vadd.f32 %v168, %v169
      %s171 = vtos %v170
      %v172 = vrcp.pop 56.0
      %v173 = vmul.f32 56.0, %v172
      %v174 = vsub.f32 1.0, %v173
      %v175 = vmul.f32 %v172, %v174
      %v176 = vadd.f32 %v172, %v175
      %vm177 = vweird.f32 %v172
      %v178 = vsel %vm177, %v172, %v176
      %s179 = vtos %v178
      %s180 = smul.f32 %s171, %s179
      %s181 = scalar_lea.smem [#allocation9], 0
      %182 = sst [smem:[%s181]] %s180
    $region25: #{improved_similarity_loss.1} parent=1 // pred_fallthru
      _
    // Predicated region
    $region26: #{improved_similarity_loss.1} parent=1 // pred_check
      _
    $region27: #{improved_similarity_loss.1} parent=1 // pred_check_branch
      %184 = sbr.rel (0) target = $region29
    $region28: #{improved_similarity_loss.1} parent=1 // pred_region
      %186 = vsyncadd [#allocation6], 0
      %s188 = sshll.u32 %s2, 4
      %s189 = int_to_ptr.hbm [resolvable:$true] %s188
      %191 = dma.smem_to_hbm [#allocation9], 16, %s189, [#allocation6]
    $region29: #{improved_similarity_loss.1} parent=1 // pred_fallthru
      _
    // Predicated region
    $region30: #{improved_similarity_loss.1} parent=1 // pred_check
      _
    $region31: #{improved_similarity_loss.1} parent=1 // pred_check_branch
      %193 = sbr.rel (0) target = $region33
    $region32: #{improved_similarity_loss.1} parent=1 // pred_region
      %195 = dma.done [#allocation6], 16
    $region33: #{improved_similarity_loss.1} parent=1 // pred_fallthru
      _
    %196 = sfence
    %197 = vsyncpa [#allocation5], 1
    %198 = vsyncpa [#allocation8], 1
    %199 = vsyncpa [#allocation6], 1

</llo_original>
